<compile_context>
chip_gen: v7x
topology: tpu7x:2x2x1
jax: 0.10.0
libtpu: 0.0.40
codegen_flags: <defaults>
</compile_context>

<pallas_src>
import jax
import jax.numpy as jnp
from jax.experimental import pallas as pl
from jax.experimental.pallas import tpu as pltpu


def _round_up(n, m):
    return ((n + m - 1) // m) * m


def actor_kernel(x_ref, w1_ref, w2_ref, w3_ref, b_ref, o_ref):
    """Fused fc1+ReLU -> fc2+ReLU -> fc3+tanh.

    Weight dtype (bf16 or f32) is taken from the refs; MXU accumulates in f32;
    bias/ReLU/tanh epilogue is f32.
    """
    h1p = w1_ref.shape[1]
    h2p = w2_ref.shape[1]
    na = w3_ref.shape[1]
    wt = w1_ref.dtype

    # Static, lane-aligned slices of the concatenated bias row (h1p, h2p are
    # multiples of 128, so every slice starts on a lane boundary).
    b1 = b_ref[:, 0:h1p]
    b2 = b_ref[:, h1p:h1p + h2p]
    b3 = b_ref[:, h1p + h2p:h1p + h2p + na]

    # fc1 + ReLU   (cast x to the weight dtype only at the MXU input)
    x = x_ref[...].astype(wt)
    h1 = jnp.dot(x, w1_ref[...], preferred_element_type=jnp.float32)
    h1 = jnp.maximum(h1 + b1, 0.0)

    # fc2 + ReLU
    h2 = jnp.dot(h1.astype(wt), w2_ref[...], preferred_element_type=jnp.float32)
    h2 = jnp.maximum(h2 + b2, 0.0)

    # fc3 + tanh   (tanh in f32 -> EUP slot, essentially free)
    h3 = jnp.dot(h2.astype(wt), w3_ref[...], preferred_element_type=jnp.float32)
    o_ref[...] = jnp.tanh(h3 + b3).astype(o_ref.dtype)


def init_actor_params(key, nb_states, nb_actions, hidden1=400, hidden2=300):
    """PyTorch-nn.Linear-style init: U(-1/sqrt(fan_in), 1/sqrt(fan_in)).

    Returns unpadded f32 params with weights already transposed to [in, out].
    """
    def linear_init(k, fan_in, fan_out):
        kw, kb = jax.random.split(k)
        bound = 1.0 / jnp.sqrt(float(fan_in))
        w = jax.random.uniform(kw, (fan_in, fan_out), jnp.float32, -bound, bound)
        b = jax.random.uniform(kb, (1, fan_out), jnp.float32, -bound, bound)
        return w, b

    k1, k2, k3 = jax.random.split(key, 3)
    w1, b1 = linear_init(k1, nb_states, hidden1)
    w2, b2 = linear_init(k2, hidden1, hidden2)
    w3, b3 = linear_init(k3, hidden2, nb_actions)
    return {"w1": w1, "b1": b1, "w2": w2, "b2": b2, "w3": w3, "b3": b3}


def prepare_kernel_params(params, weight_dtype=jnp.bfloat16):
    """Pad ONLY the hidden (lane) dims to multiples of 128; cast weights.

    - w1: [nb_states, h1_p]   (K dim left at its true size; x is unpadded too)
    - w2: [h1_p, h2_p]
    - w3: [h2_p, nb_actions]  (output dim left narrow — no 128 column pad)
    - b : [1, h1_p + h2_p + nb_actions] f32 (single concatenated bias input)
    Padding is zeros, so the math matches the unpadded module exactly.
    """
    def pad2(a, rows, cols):
        return jnp.zeros((rows, cols), a.dtype).at[:a.shape[0], :a.shape[1]].set(a)

    nb_states, hidden1 = params["w1"].shape
    hidden2, nb_actions = params["w3"].shape
    h1_p = _round_up(hidden1, 128)
    h2_p = _round_up(hidden2, 128)

    w1 = pad2(params["w1"], nb_states, h1_p).astype(weight_dtype)
    w2 = pad2(params["w2"], h1_p, h2_p).astype(weight_dtype)
    w3 = pad2(params["w3"], h2_p, nb_actions).astype(weight_dtype)
    b = jnp.concatenate(
        [
            pad2(params["b1"], 1, h1_p),
            pad2(params["b2"], 1, h2_p),
            params["b3"].reshape(1, nb_actions),
        ],
        axis=1,
    ).astype(jnp.float32)

    return {
        "w1": w1, "w2": w2, "w3": w3, "b": b,
        "nb_states": nb_states, "nb_actions": nb_actions,
    }


def actor_forward(x, kparams):
    """x: [B, nb_states] float32 (unpadded). Returns [B, nb_actions] float32."""
    B, nb_states = x.shape
    assert nb_states == kparams["nb_states"]
    nb_actions = kparams["nb_actions"]

    vmem_specs = [pl.BlockSpec(memory_space=pltpu.MemorySpace.VMEM) for _ in range(5)]
    return pl.pallas_call(
        actor_kernel,
        out_shape=jax.ShapeDtypeStruct((B, nb_actions), jnp.float32),
        in_specs=vmem_specs,   # x, w1, w2, w3, b — each whole-array resident in VMEM
        out_specs=pl.BlockSpec(memory_space=pltpu.MemorySpace.VMEM),
    )(x, kparams["w1"], kparams["w2"], kparams["w3"], kparams["b"])


def actor_forward_ref(x, params):
    """Pure-f32 reference matching the PyTorch module."""
    h1 = jnp.maximum(x @ params["w1"] + params["b1"], 0.0)
    h2 = jnp.maximum(h1 @ params["w2"] + params["b2"], 0.0)
    return jnp.tanh(h2 @ params["w3"] + params["b3"])


if __name__ == "__main__":
    key = jax.random.PRNGKey(0)
    k_params, k_x = jax.random.split(key)

    batch = 4
    nb_states = 16
    nb_actions = 4
    hidden1, hidden2 = 400, 300  # module defaults

    params = init_actor_params(k_params, nb_states, nb_actions, hidden1, hidden2)
    x = jax.random.normal(k_x, (batch, nb_states), jnp.float32)
    ref = jax.block_until_ready(actor_forward_ref(x, params))

    # bf16-weight path (default): relaxed tolerance for bf16 MXU inputs.
    kparams_bf16 = prepare_kernel_params(params, weight_dtype=jnp.bfloat16)
    out_bf16 = jax.block_until_ready(actor_forward(x, kparams_bf16))
    assert out_bf16.shape == (batch, nb_actions)
    assert jnp.allclose(out_bf16, ref, atol=2e-2, rtol=2e-2), (
        f"bf16 path: max abs err = {jnp.max(jnp.abs(out_bf16 - ref))}"
    )

    # f32-weight path: near-exact match with the reference module.
    kparams_f32 = prepare_kernel_params(params, weight_dtype=jnp.float32)
    out_f32 = jax.block_until_ready(actor_forward(x, kparams_f32))
    assert jnp.allclose(out_f32, ref, atol=1e-5, rtol=1e-5), (
        f"f32 path: max abs err = {jnp.max(jnp.abs(out_f32 - ref))}"
    )

    print("KERNEL_OK")
</pallas_src>

<mosaic_0001>
module attributes {stable_mosaic.version = 11 : i64} {
  func.func @actor_kernel(%arg0: memref<4x16xf32, #tpu.memory_space<vmem>>, %arg1: memref<16x512xbf16, #tpu.memory_space<vmem>>, %arg2: memref<512x384xbf16, #tpu.memory_space<vmem>>, %arg3: memref<384x4xbf16, #tpu.memory_space<vmem>>, %arg4: memref<1x900xf32, #tpu.memory_space<vmem>>, %arg5: memref<4x4xf32, #tpu.memory_space<vmem>>) attributes {dimension_semantics = [], scalar_prefetch = 0 : i64, scratch_operands = 0 : i64, tpu.core_type = #tpu.core_type<tc>} {
    %c0 = arith.constant 0 : index
    %c0_0 = arith.constant 0 : index
    %0 = vector.load %arg4[%c0, %c0_0] : memref<1x900xf32, #tpu.memory_space<vmem>>, vector<1x512xf32>
    %c0_1 = arith.constant 0 : index
    %c512 = arith.constant 512 : index
    %1 = vector.load %arg4[%c0_1, %c512] : memref<1x900xf32, #tpu.memory_space<vmem>>, vector<1x384xf32>
    %c0_2 = arith.constant 0 : index
    %c896 = arith.constant 896 : index
    %2 = vector.load %arg4[%c0_2, %c896] : memref<1x900xf32, #tpu.memory_space<vmem>>, vector<1x4xf32>
    %c0_3 = arith.constant 0 : index
    %c0_4 = arith.constant 0 : index
    %3 = vector.load %arg0[%c0_3, %c0_4] : memref<4x16xf32, #tpu.memory_space<vmem>>, vector<4x16xf32>
    %4 = arith.truncf %3 : vector<4x16xf32> to vector<4x16xbf16>
    %c0_5 = arith.constant 0 : index
    %c0_6 = arith.constant 0 : index
    %5 = vector.load %arg1[%c0_5, %c0_6] : memref<16x512xbf16, #tpu.memory_space<vmem>>, vector<16x512xbf16>
    %cst = arith.constant dense<0.000000e+00> : vector<4x512xf32>
    %6 = tpu.matmul %4, %5, %cst {dimension_numbers = #tpu.dot_dimension_numbers<[1], [0], [0], [1], [0, 0, 1, 1], [], []>} : vector<4x16xbf16>, vector<16x512xbf16>, vector<4x512xf32> -> vector<4x512xf32>
    %7 = vector.broadcast %0 : vector<1x512xf32> to vector<4x512xf32>
    %8 = arith.addf %6, %7 : vector<4x512xf32>
    %cst_7 = arith.constant 0.000000e+00 : f32
    %9 = vector.broadcast %cst_7 : f32 to vector<4x512xf32>
    %10 = arith.maximumf %8, %9 : vector<4x512xf32>
    %11 = arith.truncf %10 : vector<4x512xf32> to vector<4x512xbf16>
    %c0_8 = arith.constant 0 : index
    %c0_9 = arith.constant 0 : index
    %12 = vector.load %arg2[%c0_8, %c0_9] : memref<512x384xbf16, #tpu.memory_space<vmem>>, vector<512x384xbf16>
    %cst_10 = arith.constant dense<0.000000e+00> : vector<4x384xf32>
    %13 = tpu.matmul %11, %12, %cst_10 {dimension_numbers = #tpu.dot_dimension_numbers<[1], [0], [0], [1], [0, 0, 1, 1], [], []>} : vector<4x512xbf16>, vector<512x384xbf16>, vector<4x384xf32> -> vector<4x384xf32>
    %14 = vector.broadcast %1 : vector<1x384xf32> to vector<4x384xf32>
    %15 = arith.addf %13, %14 : vector<4x384xf32>
    %cst_11 = arith.constant 0.000000e+00 : f32
    %16 = vector.broadcast %cst_11 : f32 to vector<4x384xf32>
    %17 = arith.maximumf %15, %16 : vector<4x384xf32>
    %18 = arith.truncf %17 : vector<4x384xf32> to vector<4x384xbf16>
    %c0_12 = arith.constant 0 : index
    %c0_13 = arith.constant 0 : index
    %19 = vector.load %arg3[%c0_12, %c0_13] : memref<384x4xbf16, #tpu.memory_space<vmem>>, vector<384x4xbf16>
    %cst_14 = arith.constant dense<0.000000e+00> : vector<4x4xf32>
    %20 = tpu.matmul %18, %19, %cst_14 {dimension_numbers = #tpu.dot_dimension_numbers<[1], [0], [0], [1], [0, 0, 1, 1], [], []>} : vector<4x384xbf16>, vector<384x4xbf16>, vector<4x4xf32> -> vector<4x4xf32>
    %21 = vector.broadcast %2 : vector<1x4xf32> to vector<4x4xf32>
    %22 = arith.addf %20, %21 : vector<4x4xf32>
    %23 = math.tanh %22 : vector<4x4xf32>
    %c0_15 = arith.constant 0 : index
    %c0_16 = arith.constant 0 : index
    %24 = vector.load %arg5[%c0_15, %c0_16] : memref<4x4xf32, #tpu.memory_space<vmem>>, vector<4x4xf32>
    tpu.vector_store %arg5[%c0_15, %c0_16], %23 {strides = array<i32>} : memref<4x4xf32, #tpu.memory_space<vmem>>, vector<4x4xf32>,
    return
  }
}

</mosaic_0001>

<llo_original>
// kernel: tpu_custom_call.1
$region0: #{tpu_custom_call.1}
  #allocation0 [shape = 'u32[]', space=smem, size = 0x4, offset = 0x4, fixed_abs, tag = 'smem constant byte address 0x4 - core index']
  #allocation1 [shape = 'u32[144,128]{1,0:T(1,128)}', space=vmem, size = 0x12000, scoped, tag = 'internal scratch']
  %s0 = inlined_call_operand.vmem [shape: f32[4,16], index: 0, kind: input, shape index: {}]
  %s1 = inlined_call_operand.vmem [shape: bf16[16,512], index: 1, kind: input, shape index: {}]
  %s2 = inlined_call_operand.hbm [shape: bf16[512,384], index: 2, kind: input, shape index: {}]
  %s3 = inlined_call_operand.vmem [shape: bf16[384,4], index: 3, kind: input, shape index: {}]
  %s4 = inlined_call_operand.vmem [shape: f32[1,900], index: 4, kind: input, shape index: {}]
  %s5 = inlined_call_operand.hbm [shape: f32[4,4], index: 5, kind: output, shape index: {}]
  %s6 = sld [smem:[#allocation0]]
  $region34: #{tpu_custom_call.1} parent=0
    _
  %s8 = ssub.s32 1, %s6
  %s9 = scalar_select 0, %s8, %s6
  $region1: #{tpu_custom_call.1} parent=0
    #allocation2 [shape = 'u8[393216]{0}', space=vmem, size = 0x60000, scoped, tag = 'input window, operand 2, single buffered']
    #allocation3 [shape = 's32[1]{0}', space=sflag, size = 0x4, scoped, tag = 'scoped memory for tpu_custom_call.1']
    #allocation4 [shape = 's32[1]{0}', space=sflag, size = 0x4, scoped, tag = 'scoped memory for tpu_custom_call.1']
    #allocation5 [shape = 'u8[2048]{0}', space=vmem, size = 0x800, scoped, tag = 'output window, operand 0, single buffered']
    %10 = vsyncpa [#allocation3], 0
    %11 = vsyncpa [#allocation4], 0
    // Predicated region
    $region2: #{tpu_custom_call.1} parent=1 // pred_check
      _
    $region3: #{tpu_custom_call.1} parent=1 // pred_check_branch
      %13 = sbr.rel (0) target = $region5
    $region4: #{tpu_custom_call.1} parent=1 // pred_region
      _
    $region5: #{tpu_custom_call.1} parent=1 // pred_fallthru
      _
    // Predicated region
    $region6: #{tpu_custom_call.1} parent=1 // pred_check
      _
    $region7: #{tpu_custom_call.1} parent=1 // pred_check_branch
      %15 = sbr.rel (0) target = $region9
    $region8: #{tpu_custom_call.1} parent=1 // pred_region
      _
    $region9: #{tpu_custom_call.1} parent=1 // pred_fallthru
      _
    // Predicated region
    $region10: #{tpu_custom_call.1} parent=1 // pred_check
      _
    $region11: #{tpu_custom_call.1} parent=1 // pred_check_branch
      %17 = sbr.rel (0) target = $region13
    $region12: #{tpu_custom_call.1} parent=1 // pred_region
      %s19 = ssub.s32 12288, 12288
      %20 = vsyncadd [#allocation3], %s19
      %s21 = sshll.u32 [#allocation2], 4
      %s22 = int_to_ptr.vmem [resolvable:$true] %s21
      %27 = dma.hbm_to_vmem [thread:$0]  %s2, 12288, %s22, [#allocation3], 192, 192, 12
    $region13: #{tpu_custom_call.1} parent=1 // pred_fallthru
      _
    // Predicated region
    $region14: #{tpu_custom_call.1} parent=1 // pred_check
      _
    $region15: #{tpu_custom_call.1} parent=1 // pred_check_branch
      %29 = sbr.rel (0) target = $region17
    $region16: #{tpu_custom_call.1} parent=1 // pred_region
      _
    $region17: #{tpu_custom_call.1} parent=1 // pred_fallthru
      _
    // Predicated region
    $region18: #{tpu_custom_call.1} parent=1 // pred_check
      _
    $region19: #{tpu_custom_call.1} parent=1 // pred_check_branch
      %31 = sbr.rel (0) target = $region21
    $region20: #{tpu_custom_call.1} parent=1 // pred_region
      _
    $region21: #{tpu_custom_call.1} parent=1 // pred_fallthru
      _
    // Predicated region
    $region22: #{tpu_custom_call.1} parent=1 // pred_check
      _
    $region23: #{tpu_custom_call.1} parent=1 // pred_check_branch
      %33 = sbr.rel (0) target = $region25
    $region24: #{tpu_custom_call.1} parent=1 // pred_region
      %34 = dma.done [#allocation3], 12288
    $region25: #{tpu_custom_call.1} parent=1 // pred_fallthru
      _
    %v36 = vld [vmem:[%s4] sm:$0xf]
    %v37 = vld [vmem:[%s4 + $0x4] sm:$0x7]
    %v38 = vld [vmem:[%s4 + $0x7] sm:$0x1]
    %v39 = vld [vmem:[%s0] sm:$0xf]
    %v40 = vpack.c.bf16 %v39, %v39
    %v41 = vld [vmem:[%s1] sm:$0xff]
    %v42 = vld [vmem:[%s1 + $0x8] sm:$0xff]
    %v43 = vld [vmem:[%s1 + $0x10] sm:$0xff]
    %v44 = vld [vmem:[%s1 + $0x18] sm:$0xff]
    %v46 = vlaneseq
    %v47 = vshrl.u32 %v46, 7
    %v48 = vsub.s32 0, %v47
    %v49 = vrot.slane %v36, %v48
    %v50 = vlaneseq
    %v51 = vshrl.u32 %v50, 7
    %v52 = vsub.s32 1, %v51
    %v53 = vrot.slane %v36, %v52
    %v54 = vlaneseq
    %v55 = vshrl.u32 %v54, 7
    %v56 = vsub.s32 2, %v55
    %v57 = vrot.slane %v36, %v56
    %v58 = vlaneseq
    %v59 = vshrl.u32 %v58, 7
    %v60 = vsub.s32 3, %v59
    %v61 = vrot.slane %v36, %v60
    %v70 = vunpack.c.l.b16 %v41
    %v71 = vunpack.c.h.b16 %v41
    %v72 = vunpack.c.l.b16 %v42
    %v73 = vunpack.c.h.b16 %v42
    %v74 = vunpack.c.l.b16 %v43
    %v75 = vunpack.c.h.b16 %v43
    %v76 = vunpack.c.l.b16 %v44
    %v77 = vunpack.c.h.b16 %v44
    %v78 = vpack.c.b16 %v74, %v70
    %v79 = vpack.c.b16 %v75, %v71
    %v80 = vpack.c.b16 %v76, %v72
    %v81 = vpack.c.b16 %v77, %v73
    %vm86 = vcmask 130048
    %v88 = vsel %vm86, %v40, 0
    %90 = vmatprep.subr.bf16.mxu0 %v79
    %91 = vmatpush1.bf16.msra.mxu0 %v78
    %92 = vmatprep.subr.bf16.mxu0 0
    %93 = vmatpush1.bf16.msra.mxu0 0
    %94 = vmatprep.subr.bf16.mxu0 0
    %95 = vmatpush1.bf16.msra.mxu0 0
    %96 = vmatprep.subr.bf16.mxu0 0
    %97 = vmatpush1.bf16.msra.mxu0 0
    %98 = vmatprep.subr.bf16.mxu0 0
    %99 = vmatpush1.bf16.msra.mxu0 0
    %100 = vmatprep.subr.bf16.mxu0 0
    %101 = vmatpush1.bf16.msra.mxu0 0
    %102 = vmatprep.subr.bf16.mxu0 0
    %103 = vmatpush1.bf16.msra.mxu0 0
    %104 = vmatprep.subr.bf16.mxu0 0
    %105 = vmatpush1.bf16.msra.mxu0 0
    %106 = vmatprep.subr.bf16.mxu0 0
    %107 = vmatpush1.bf16.msra.mxu0 0
    %108 = vmatprep.subr.bf16.mxu0 0
    %109 = vmatpush1.bf16.msra.mxu0 0
    %110 = vmatprep.subr.bf16.mxu0 0
    %111 = vmatpush1.bf16.msra.mxu0 0
    %112 = vmatprep.subr.bf16.mxu0 0
    %113 = vmatpush1.bf16.msra.mxu0 0
    %114 = vmatprep.subr.bf16.mxu0 0
    %115 = vmatpush1.bf16.msra.mxu0 0
    %116 = vmatprep.subr.bf16.mxu0 0
    %117 = vmatpush1.bf16.msra.mxu0 0
    %118 = vmatprep.subr.bf16.mxu0 0
    %119 = vmatpush1.bf16.msra.mxu0 0
    %120 = vmatprep.subr.bf16.mxu0 0
    %121 = vmatpush1.bf16.msra.mxu0 0
    %122 = vmatprep.mubr.bf16.mxu0 0
    %123 = vmatmul.mubr.bf16.gmra.mrb[0].mxu0 %v88
    %v124 = vpop.f32.mrb[0].mxu0
    %v125 = vadd.f32 %v49, %v124
    %v126 = vpop.f32.mrb[0].mxu0
    %v127 = vadd.f32 %v53, %v126
    %v128 = vpop.f32.mrb[0].mxu0
    %v129 = vpop.f32.mrb[0].mxu0
    %130 = vdwg.mxu0
    %131 = vmatprep.subr.bf16.mxu0 %v81
    %132 = vmatpush1.bf16.msra.mxu0 %v80
    %133 = vmatprep.subr.bf16.mxu0 0
    %134 = vmatpush1.bf16.msra.mxu0 0
    %135 = vmatprep.subr.bf16.mxu0 0
    %136 = vmatpush1.bf16.msra.mxu0 0
    %137 = vmatprep.subr.bf16.mxu0 0
    %138 = vmatpush1.bf16.msra.mxu0 0
    %139 = vmatprep.subr.bf16.mxu0 0
    %140 = vmatpush1.bf16.msra.mxu0 0
    %141 = vmatprep.subr.bf16.mxu0 0
    %142 = vmatpush1.bf16.msra.mxu0 0
    %143 = vmatprep.subr.bf16.mxu0 0
    %144 = vmatpush1.bf16.msra.mxu0 0
    %145 = vmatprep.subr.bf16.mxu0 0
    %146 = vmatpush1.bf16.msra.mxu0 0
    %147 = vmatprep.subr.bf16.mxu0 0
    %148 = vmatpush1.bf16.msra.mxu0 0
    %149 = vmatprep.subr.bf16.mxu0 0
    %150 = vmatpush1.bf16.msra.mxu0 0
    %151 = vmatprep.subr.bf16.mxu0 0
    %152 = vmatpush1.bf16.msra.mxu0 0
    %153 = vmatprep.subr.bf16.mxu0 0
    %154 = vmatpush1.bf16.msra.mxu0 0
    %155 = vmatprep.subr.bf16.mxu0 0
    %156 = vmatpush1.bf16.msra.mxu0 0
    %157 = vmatprep.subr.bf16.mxu0 0
    %158 = vmatpush1.bf16.msra.mxu0 0
    %159 = vmatprep.subr.bf16.mxu0 0
    %160 = vmatpush1.bf16.msra.mxu0 0
    %161 = vmatprep.subr.bf16.mxu0 0
    %162 = vmatpush1.bf16.msra.mxu0 0
    %163 = vmatprep.mubr.bf16.mxu0 0
    %164 = vmatmul.mubr.bf16.gmra.mrb[0].mxu0 %v88
    %v165 = vpop.f32.mrb[0].mxu0
    %v166 = vadd.f32 %v57, %v165
    %v167 = vpop.f32.mrb[0].mxu0
    %v168 = vadd.f32 %v61, %v167
    %v169 = vpop.f32.mrb[0].mxu0
    %v170 = vpop.f32.mrb[0].mxu0
    %171 = vdwg.mxu0
    %v172 = vmax.f32 %v125, 0.0
    %v173 = vmax.f32 %v127, 0.0
    %v174 = vmax.f32 %v166, 0.0
    %v175 = vmax.f32 %v168, 0.0
    %v176 = vpack.c.bf16 %v172, %v172
    %v177 = vpack.c.bf16 %v173, %v173
    %v178 = vpack.c.bf16 %v174, %v174
    %v179 = vpack.c.bf16 %v175, %v175
    %v180 = vld [vmem:[#allocation2] sm:$0xff]
    %v181 = vld [vmem:[#allocation2 + $0x8] sm:$0xf]
    %v182 = vld [vmem:[#allocation2 + $0xc] sm:$0xff]
    %v183 = vld [vmem:[#allocation2 + $0x14] sm:$0xf]
    %v184 = vld [vmem:[#allocation2 + $0x18] sm:$0xff]
    %v185 = vld [vmem:[#allocation2 + $0x20] sm:$0xf]
    %v186 = vld [vmem:[#allocation2 + $0x24] sm:$0xff]
    %v187 = vld [vmem:[#allocation2 + $0x2c] sm:$0xf]
    %v188 = vld [vmem:[#allocation2 + $0x30] sm:$0xff]
    %v189 = vld [vmem:[#allocation2 + $0x38] sm:$0xf]
    %v190 = vld [vmem:[#allocation2 + $0x3c] sm:$0xff]
    %v191 = vld [vmem:[#allocation2 + $0x44] sm:$0xf]
    %v192 = vld [vmem:[#allocation2 + $0x48] sm:$0xff]
    %v193 = vld [vmem:[#allocation2 + $0x50] sm:$0xf]
    %v194 = vld [vmem:[#allocation2 + $0x54] sm:$0xff]
    %v195 = vld [vmem:[#allocation2 + $0x5c] sm:$0xf]
    %v196 = vld [vmem:[#allocation2 + $0x60] sm:$0xff]
    %v197 = vld [vmem:[#allocation2 + $0x68] sm:$0xf]
    %v198 = vld [vmem:[#allocation2 + $0x6c] sm:$0xff]
    %v199 = vld [vmem:[#allocation2 + $0x74] sm:$0xf]
    %v200 = vld [vmem:[#allocation2 + $0x78] sm:$0xff]
    %v201 = vld [vmem:[#allocation2 + $0x80] sm:$0xf]
    %v202 = vld [vmem:[#allocation2 + $0x84] sm:$0xff]
    %v203 = vld [vmem:[#allocation2 + $0x8c] sm:$0xf]
    %v204 = vld [vmem:[#allocation2 + $0x90] sm:$0xff]
    %v205 = vld [vmem:[#allocation2 + $0x98] sm:$0xf]
    %v206 = vld [vmem:[#allocation2 + $0x9c] sm:$0xff]
    %v207 = vld [vmem:[#allocation2 + $0xa4] sm:$0xf]
    %v208 = vld [vmem:[#allocation2 + $0xa8] sm:$0xff]
    %v209 = vld [vmem:[#allocation2 + $0xb0] sm:$0xf]
    %v210 = vld [vmem:[#allocation2 + $0xb4] sm:$0xff]
    %v211 = vld [vmem:[#allocation2 + $0xbc] sm:$0xf]
    %v212 = vld [vmem:[#allocation2 + $0xc0] sm:$0xff]
    %v213 = vld [vmem:[#allocation2 + $0xc8] sm:$0xf]
    %v214 = vld [vmem:[#allocation2 + $0xcc] sm:$0xff]
    %v215 = vld [vmem:[#allocation2 + $0xd4] sm:$0xf]
    %v216 = vld [vmem:[#allocation2 + $0xd8] sm:$0xff]
    %v217 = vld [vmem:[#allocation2 + $0xe0] sm:$0xf]
    %v218 = vld [vmem:[#allocation2 + $0xe4] sm:$0xff]
    %v219 = vld [vmem:[#allocation2 + $0xec] sm:$0xf]
    %v220 = vld [vmem:[#allocation2 + $0xf0] sm:$0xff]
    %v221 = vld [vmem:[#allocation2 + $0xf8] sm:$0xf]
    %v222 = vld [vmem:[#allocation2 + $0xfc] sm:$0xff]
    %v223 = vld [vmem:[#allocation2 + $0x104] sm:$0xf]
    %v224 = vld [vmem:[#allocation2 + $0x108] sm:$0xff]
    %v225 = vld [vmem:[#allocation2 + $0x110] sm:$0xf]
    %v226 = vld [vmem:[#allocation2 + $0x114] sm:$0xff]
    %v227 = vld [vmem:[#allocation2 + $0x11c] sm:$0xf]
    %v228 = vld [vmem:[#allocation2 + $0x120] sm:$0xff]
    %v229 = vld [vmem:[#allocation2 + $0x128] sm:$0xf]
    %v230 = vld [vmem:[#allocation2 + $0x12c] sm:$0xff]
    %v231 = vld [vmem:[#allocation2 + $0x134] sm:$0xf]
    %v232 = vld [vmem:[#allocation2 + $0x138] sm:$0xff]
    %v233 = vld [vmem:[#allocation2 + $0x140] sm:$0xf]
    %v234 = vld [vmem:[#allocation2 + $0x144] sm:$0xff]
    %v235 = vld [vmem:[#allocation2 + $0x14c] sm:$0xf]
    %v236 = vld [vmem:[#allocation2 + $0x150] sm:$0xff]
    %v237 = vld [vmem:[#allocation2 + $0x158] sm:$0xf]
    %v238 = vld [vmem:[#allocation2 + $0x15c] sm:$0xff]
    %v239 = vld [vmem:[#allocation2 + $0x164] sm:$0xf]
    %v240 = vld [vmem:[#allocation2 + $0x168] sm:$0xff]
    %v241 = vld [vmem:[#allocation2 + $0x170] sm:$0xf]
    %v242 = vld [vmem:[#allocation2 + $0x174] sm:$0xff]
    %v243 = vld [vmem:[#allocation2 + $0x17c] sm:$0xf]
    %v244 = vld [vmem:[#allocation2 + $0x180] sm:$0xff]
    %v245 = vld [vmem:[#allocation2 + $0x188] sm:$0xf]
    %v246 = vld [vmem:[#allocation2 + $0x18c] sm:$0xff]
    %v247 = vld [vmem:[#allocation2 + $0x194] sm:$0xf]
    %v248 = vld [vmem:[#allocation2 + $0x198] sm:$0xff]
    %v249 = vld [vmem:[#allocation2 + $0x1a0] sm:$0xf]
    %v250 = vld [vmem:[#allocation2 + $0x1a4] sm:$0xff]
    %v251 = vld [vmem:[#allocation2 + $0x1ac] sm:$0xf]
    %v252 = vld [vmem:[#allocation2 + $0x1b0] sm:$0xff]
    %v253 = vld [vmem:[#allocation2 + $0x1b8] sm:$0xf]
    %v254 = vld [vmem:[#allocation2 + $0x1bc] sm:$0xff]
    %v255 = vld [vmem:[#allocation2 + $0x1c4] sm:$0xf]
    %v256 = vld [vmem:[#allocation2 + $0x1c8] sm:$0xff]
    %v257 = vld [vmem:[#allocation2 + $0x1d0] sm:$0xf]
    %v258 = vld [vmem:[#allocation2 + $0x1d4] sm:$0xff]
    %v259 = vld [vmem:[#allocation2 + $0x1dc] sm:$0xf]
    %v260 = vld [vmem:[#allocation2 + $0x1e0] sm:$0xff]
    %v261 = vld [vmem:[#allocation2 + $0x1e8] sm:$0xf]
    %v262 = vld [vmem:[#allocation2 + $0x1ec] sm:$0xff]
    %v263 = vld [vmem:[#allocation2 + $0x1f4] sm:$0xf]
    %v264 = vld [vmem:[#allocation2 + $0x1f8] sm:$0xff]
    %v265 = vld [vmem:[#allocation2 + $0x200] sm:$0xf]
    %v266 = vld [vmem:[#allocation2 + $0x204] sm:$0xff]
    %v267 = vld [vmem:[#allocation2 + $0x20c] sm:$0xf]
    %v268 = vld [vmem:[#allocation2 + $0x210] sm:$0xff]
    %v269 = vld [vmem:[#allocation2 + $0x218] sm:$0xf]
    %v270 = vld [vmem:[#allocation2 + $0x21c] sm:$0xff]
    %v271 = vld [vmem:[#allocation2 + $0x224] sm:$0xf]
    %v272 = vld [vmem:[#allocation2 + $0x228] sm:$0xff]
    %v273 = vld [vmem:[#allocation2 + $0x230] sm:$0xf]
    %v274 = vld [vmem:[#allocation2 + $0x234] sm:$0xff]
    %v275 = vld [vmem:[#allocation2 + $0x23c] sm:$0xf]
    %v276 = vld [vmem:[#allocation2 + $0x240] sm:$0xff]
    %v277 = vld [vmem:[#allocation2 + $0x248] sm:$0xf]
    %v278 = vld [vmem:[#allocation2 + $0x24c] sm:$0xff]
    %v279 = vld [vmem:[#allocation2 + $0x254] sm:$0xf]
    %v280 = vld [vmem:[#allocation2 + $0x258] sm:$0xff]
    %v281 = vld [vmem:[#allocation2 + $0x260] sm:$0xf]
    %v282 = vld [vmem:[#allocation2 + $0x264] sm:$0xff]
    %v283 = vld [vmem:[#allocation2 + $0x26c] sm:$0xf]
    %v284 = vld [vmem:[#allocation2 + $0x270] sm:$0xff]
    %v285 = vld [vmem:[#allocation2 + $0x278] sm:$0xf]
    %v286 = vld [vmem:[#allocation2 + $0x27c] sm:$0xff]
    %v287 = vld [vmem:[#allocation2 + $0x284] sm:$0xf]
    %v288 = vld [vmem:[#allocation2 + $0x288] sm:$0xff]
    %v289 = vld [vmem:[#allocation2 + $0x290] sm:$0xf]
    %v290 = vld [vmem:[#allocation2 + $0x294] sm:$0xff]
    %v291 = vld [vmem:[#allocation2 + $0x29c] sm:$0xf]
    %v292 = vld [vmem:[#allocation2 + $0x2a0] sm:$0xff]
    %v293 = vld [vmem:[#allocation2 + $0x2a8] sm:$0xf]
    %v294 = vld [vmem:[#allocation2 + $0x2ac] sm:$0xff]
    %v295 = vld [vmem:[#allocation2 + $0x2b4] sm:$0xf]
    %v296 = vld [vmem:[#allocation2 + $0x2b8] sm:$0xff]
    %v297 = vld [vmem:[#allocation2 + $0x2c0] sm:$0xf]
    %v298 = vld [vmem:[#allocation2 + $0x2c4] sm:$0xff]
    %v299 = vld [vmem:[#allocation2 + $0x2cc] sm:$0xf]
    %v300 = vld [vmem:[#allocation2 + $0x2d0] sm:$0xff]
    %v301 = vld [vmem:[#allocation2 + $0x2d8] sm:$0xf]
    %v302 = vld [vmem:[#allocation2 + $0x2dc] sm:$0xff]
    %v303 = vld [vmem:[#allocation2 + $0x2e4] sm:$0xf]
    %v304 = vld [vmem:[#allocation2 + $0x2e8] sm:$0xff]
    %v305 = vld [vmem:[#allocation2 + $0x2f0] sm:$0xf]
    %v306 = vld [vmem:[#allocation2 + $0x2f4] sm:$0xff]
    %v307 = vld [vmem:[#allocation2 + $0x2fc] sm:$0xf]
    %v309 = vlaneseq
    %v310 = vshrl.u32 %v309, 7
    %v311 = vsub.s32 0, %v310
    %v312 = vrot.slane %v37, %v311
    %v313 = vlaneseq
    %v314 = vshrl.u32 %v313, 7
    %v315 = vsub.s32 1, %v314
    %v316 = vrot.slane %v37, %v315
    %v317 = vlaneseq
    %v318 = vshrl.u32 %v317, 7
    %v319 = vsub.s32 2, %v318
    %v320 = vrot.slane %v37, %v319
    %v452 = vunpack.c.l.b16 %v180
    %v453 = vunpack.c.h.b16 %v180
    %v454 = vunpack.c.l.b16 %v181
    %v455 = vunpack.c.l.b16 %v182
    %v456 = vunpack.c.h.b16 %v182
    %v457 = vunpack.c.l.b16 %v183
    %v458 = vunpack.c.l.b16 %v184
    %v459 = vunpack.c.h.b16 %v184
    %v460 = vunpack.c.l.b16 %v185
    %v461 = vunpack.c.l.b16 %v186
    %v462 = vunpack.c.h.b16 %v186
    %v463 = vunpack.c.l.b16 %v187
    %v464 = vunpack.c.l.b16 %v188
    %v465 = vunpack.c.h.b16 %v188
    %v466 = vunpack.c.l.b16 %v189
    %v467 = vunpack.c.l.b16 %v190
    %v468 = vunpack.c.h.b16 %v190
    %v469 = vunpack.c.l.b16 %v191
    %v470 = vunpack.c.l.b16 %v192
    %v471 = vunpack.c.h.b16 %v192
    %v472 = vunpack.c.l.b16 %v193
    %v473 = vunpack.c.l.b16 %v194
    %v474 = vunpack.c.h.b16 %v194
    %v475 = vunpack.c.l.b16 %v195
    %v476 = vunpack.c.l.b16 %v196
    %v477 = vunpack.c.h.b16 %v196
    %v478 = vunpack.c.l.b16 %v197
    %v479 = vunpack.c.l.b16 %v198
    %v480 = vunpack.c.h.b16 %v198
    %v481 = vunpack.c.l.b16 %v199
    %v482 = vunpack.c.l.b16 %v200
    %v483 = vunpack.c.h.b16 %v200
    %v484 = vunpack.c.l.b16 %v201
    %v485 = vunpack.c.l.b16 %v202
    %v486 = vunpack.c.h.b16 %v202
    %v487 = vunpack.c.l.b16 %v203
    %v488 = vunpack.c.l.b16 %v204
    %v489 = vunpack.c.h.b16 %v204
    %v490 = vunpack.c.l.b16 %v205
    %v491 = vunpack.c.l.b16 %v206
    %v492 = vunpack.c.h.b16 %v206
    %v493 = vunpack.c.l.b16 %v207
    %v494 = vunpack.c.l.b16 %v208
    %v495 = vunpack.c.h.b16 %v208
    %v496 = vunpack.c.l.b16 %v209
    %v497 = vunpack.c.l.b16 %v210
    %v498 = vunpack.c.h.b16 %v210
    %v499 = vunpack.c.l.b16 %v211
    %v500 = vunpack.c.l.b16 %v212
    %v501 = vunpack.c.h.b16 %v212
    %v502 = vunpack.c.l.b16 %v213
    %v503 = vunpack.c.l.b16 %v214
    %v504 = vunpack.c.h.b16 %v214
    %v505 = vunpack.c.l.b16 %v215
    %v506 = vunpack.c.l.b16 %v216
    %v507 = vunpack.c.h.b16 %v216
    %v508 = vunpack.c.l.b16 %v217
    %v509 = vunpack.c.l.b16 %v218
    %v510 = vunpack.c.h.b16 %v218
    %v511 = vunpack.c.l.b16 %v219
    %v512 = vunpack.c.l.b16 %v220
    %v513 = vunpack.c.h.b16 %v220
    %v514 = vunpack.c.l.b16 %v221
    %v515 = vunpack.c.l.b16 %v222
    %v516 = vunpack.c.h.b16 %v222
    %v517 = vunpack.c.l.b16 %v223
    %v518 = vunpack.c.l.b16 %v224
    %v519 = vunpack.c.h.b16 %v224
    %v520 = vunpack.c.l.b16 %v225
    %v521 = vunpack.c.l.b16 %v226
    %v522 = vunpack.c.h.b16 %v226
    %v523 = vunpack.c.l.b16 %v227
    %v524 = vunpack.c.l.b16 %v228
    %v525 = vunpack.c.h.b16 %v228
    %v526 = vunpack.c.l.b16 %v229
    %v527 = vunpack.c.l.b16 %v230
    %v528 = vunpack.c.h.b16 %v230
    %v529 = vunpack.c.l.b16 %v231
    %v530 = vunpack.c.l.b16 %v232
    %v531 = vunpack.c.h.b16 %v232
    %v532 = vunpack.c.l.b16 %v233
    %v533 = vunpack.c.l.b16 %v234
    %v534 = vunpack.c.h.b16 %v234
    %v535 = vunpack.c.l.b16 %v235
    %v536 = vunpack.c.l.b16 %v236
    %v537 = vunpack.c.h.b16 %v236
    %v538 = vunpack.c.l.b16 %v237
    %v539 = vunpack.c.l.b16 %v238
    %v540 = vunpack.c.h.b16 %v238
    %v541 = vunpack.c.l.b16 %v239
    %v542 = vunpack.c.l.b16 %v240
    %v543 = vunpack.c.h.b16 %v240
    %v544 = vunpack.c.l.b16 %v241
    %v545 = vunpack.c.l.b16 %v242
    %v546 = vunpack.c.h.b16 %v242
    %v547 = vunpack.c.l.b16 %v243
    %v548 = vunpack.c.l.b16 %v244
    %v549 = vunpack.c.h.b16 %v244
    %v550 = vunpack.c.l.b16 %v245
    %v551 = vunpack.c.l.b16 %v246
    %v552 = vunpack.c.h.b16 %v246
    %v553 = vunpack.c.l.b16 %v247
    %v554 = vunpack.c.l.b16 %v248
    %v555 = vunpack.c.h.b16 %v248
    %v556 = vunpack.c.l.b16 %v249
    %v557 = vunpack.c.l.b16 %v250
    %v558 = vunpack.c.h.b16 %v250
    %v559 = vunpack.c.l.b16 %v251
    %v560 = vunpack.c.l.b16 %v252
    %v561 = vunpack.c.h.b16 %v252
    %v562 = vunpack.c.l.b16 %v253
    %v563 = vunpack.c.l.b16 %v254
    %v564 = vunpack.c.h.b16 %v254
    %v565 = vunpack.c.l.b16 %v255
    %v566 = vunpack.c.l.b16 %v256
    %v567 = vunpack.c.h.b16 %v256
    %v568 = vunpack.c.l.b16 %v257
    %v569 = vunpack.c.l.b16 %v258
    %v570 = vunpack.c.h.b16 %v258
    %v571 = vunpack.c.l.b16 %v259
    %v572 = vunpack.c.l.b16 %v260
    %v573 = vunpack.c.h.b16 %v260
    %v574 = vunpack.c.l.b16 %v261
    %v575 = vunpack.c.l.b16 %v262
    %v576 = vunpack.c.h.b16 %v262
    %v577 = vunpack.c.l.b16 %v263
    %v578 = vunpack.c.l.b16 %v264
    %v579 = vunpack.c.h.b16 %v264
    %v580 = vunpack.c.l.b16 %v265
    %v581 = vunpack.c.l.b16 %v266
    %v582 = vunpack.c.h.b16 %v266
    %v583 = vunpack.c.l.b16 %v267
    %v584 = vunpack.c.l.b16 %v268
    %v585 = vunpack.c.h.b16 %v268
    %v586 = vunpack.c.l.b16 %v269
    %v587 = vunpack.c.l.b16 %v270
    %v588 = vunpack.c.h.b16 %v270
    %v589 = vunpack.c.l.b16 %v271
    %v590 = vunpack.c.l.b16 %v272
    %v591 = vunpack.c.h.b16 %v272
    %v592 = vunpack.c.l.b16 %v273
    %v593 = vunpack.c.l.b16 %v274
    %v594 = vunpack.c.h.b16 %v274
    %v595 = vunpack.c.l.b16 %v275
    %v596 = vunpack.c.l.b16 %v276
    %v597 = vunpack.c.h.b16 %v276
    %v598 = vunpack.c.l.b16 %v277
    %v599 = vunpack.c.l.b16 %v278
    %v600 = vunpack.c.h.b16 %v278
    %v601 = vunpack.c.l.b16 %v279
    %v602 = vunpack.c.l.b16 %v280
    %v603 = vunpack.c.h.b16 %v280
    %v604 = vunpack.c.l.b16 %v281
    %v605 = vunpack.c.l.b16 %v282
    %v606 = vunpack.c.h.b16 %v282
    %v607 = vunpack.c.l.b16 %v283
    %v608 = vunpack.c.l.b16 %v284
    %v609 = vunpack.c.h.b16 %v284
    %v610 = vunpack.c.l.b16 %v285
    %v611 = vunpack.c.l.b16 %v286
    %v612 = vunpack.c.h.b16 %v286
    %v613 = vunpack.c.l.b16 %v287
    %v614 = vunpack.c.l.b16 %v288
    %v615 = vunpack.c.h.b16 %v288
    %v616 = vunpack.c.l.b16 %v289
    %v617 = vunpack.c.l.b16 %v290
    %v618 = vunpack.c.h.b16 %v290
    %v619 = vunpack.c.l.b16 %v291
    %v620 = vunpack.c.l.b16 %v292
    %v621 = vunpack.c.h.b16 %v292
    %v622 = vunpack.c.l.b16 %v293
    %v623 = vunpack.c.l.b16 %v294
    %v624 = vunpack.c.h.b16 %v294
    %v625 = vunpack.c.l.b16 %v295
    %v626 = vunpack.c.l.b16 %v296
    %v627 = vunpack.c.h.b16 %v296
    %v628 = vunpack.c.l.b16 %v297
    %v629 = vunpack.c.l.b16 %v298
    %v630 = vunpack.c.h.b16 %v298
    %v631 = vunpack.c.l.b16 %v299
    %v632 = vunpack.c.l.b16 %v300
    %v633 = vunpack.c.h.b16 %v300
    %v634 = vunpack.c.l.b16 %v301
    %v635 = vunpack.c.l.b16 %v302
    %v636 = vunpack.c.h.b16 %v302
    %v637 = vunpack.c.l.b16 %v303
    %v638 = vunpack.c.l.b16 %v304
    %v639 = vunpack.c.h.b16 %v304
    %v640 = vunpack.c.l.b16 %v305
    %v641 = vunpack.c.l.b16 %v306
    %v642 = vunpack.c.h.b16 %v306
    %v643 = vunpack.c.l.b16 %v307
    %v644 = vpack.c.b16 %v455, %v452
    %v645 = vpack.c.b16 %v456, %v453
    %v646 = vpack.c.b16 %v457, %v454
    %v647 = vpack.c.b16 %v461, %v458
    %v648 = vpack.c.b16 %v462, %v459
    %v649 = vpack.c.b16 %v463, %v460
    %v650 = vpack.c.b16 %v467, %v464
    %v651 = vpack.c.b16 %v468, %v465
    %v652 = vpack.c.b16 %v469, %v466
    %v653 = vpack.c.b16 %v473, %v470
    %v654 = vpack.c.b16 %v474, %v471
    %v655 = vpack.c.b16 %v475, %v472
    %v656 = vpack.c.b16 %v479, %v476
    %v657 = vpack.c.b16 %v480, %v477
    %v658 = vpack.c.b16 %v481, %v478
    %v659 = vpack.c.b16 %v485, %v482
    %v660 = vpack.c.b16 %v486, %v483
    %v661 = vpack.c.b16 %v487, %v484
    %v662 = vpack.c.b16 %v491, %v488
    %v663 = vpack.c.b16 %v492, %v489
    %v664 = vpack.c.b16 %v493, %v490
    %v665 = vpack.c.b16 %v497, %v494
    %v666 = vpack.c.b16 %v498, %v495
    %v667 = vpack.c.b16 %v499, %v496
    %v668 = vpack.c.b16 %v503, %v500
    %v669 = vpack.c.b16 %v504, %v501
    %v670 = vpack.c.b16 %v505, %v502
    %v671 = vpack.c.b16 %v509, %v506
    %v672 = vpack.c.b16 %v510, %v507
    %v673 = vpack.c.b16 %v511, %v508
    %v674 = vpack.c.b16 %v515, %v512
    %v675 = vpack.c.b16 %v516, %v513
    %v676 = vpack.c.b16 %v517, %v514
    %v677 = vpack.c.b16 %v521, %v518
    %v678 = vpack.c.b16 %v522, %v519
    %v679 = vpack.c.b16 %v523, %v520
    %v680 = vpack.c.b16 %v527, %v524
    %v681 = vpack.c.b16 %v528, %v525
    %v682 = vpack.c.b16 %v529, %v526
    %v683 = vpack.c.b16 %v533, %v530
    %v684 = vpack.c.b16 %v534, %v531
    %v685 = vpack.c.b16 %v535, %v532
    %v686 = vpack.c.b16 %v539, %v536
    %v687 = vpack.c.b16 %v540, %v537
    %v688 = vpack.c.b16 %v541, %v538
    %v689 = vpack.c.b16 %v545, %v542
    %v690 = vpack.c.b16 %v546, %v543
    %v691 = vpack.c.b16 %v547, %v544
    %v692 = vpack.c.b16 %v551, %v548
    %v693 = vpack.c.b16 %v552, %v549
    %v694 = vpack.c.b16 %v553, %v550
    %v695 = vpack.c.b16 %v557, %v554
    %v696 = vpack.c.b16 %v558, %v555
    %v697 = vpack.c.b16 %v559, %v556
    %v698 = vpack.c.b16 %v563, %v560
    %v699 = vpack.c.b16 %v564, %v561
    %v700 = vpack.c.b16 %v565, %v562
    %v701 = vpack.c.b16 %v569, %v566
    %v702 = vpack.c.b16 %v570, %v567
    %v703 = vpack.c.b16 %v571, %v568
    %v704 = vpack.c.b16 %v575, %v572
    %v705 = vpack.c.b16 %v576, %v573
    %v706 = vpack.c.b16 %v577, %v574
    %v707 = vpack.c.b16 %v581, %v578
    %v708 = vpack.c.b16 %v582, %v579
    %v709 = vpack.c.b16 %v583, %v580
    %v710 = vpack.c.b16 %v587, %v584
    %v711 = vpack.c.b16 %v588, %v585
    %v712 = vpack.c.b16 %v589, %v586
    %v713 = vpack.c.b16 %v593, %v590
    %v714 = vpack.c.b16 %v594, %v591
    %v715 = vpack.c.b16 %v595, %v592
    %v716 = vpack.c.b16 %v599, %v596
    %v717 = vpack.c.b16 %v600, %v597
    %v718 = vpack.c.b16 %v601, %v598
    %v719 = vpack.c.b16 %v605, %v602
    %v720 = vpack.c.b16 %v606, %v603
    %v721 = vpack.c.b16 %v607, %v604
    %v722 = vpack.c.b16 %v611, %v608
    %v723 = vpack.c.b16 %v612, %v609
    %v724 = vpack.c.b16 %v613, %v610
    %v725 = vpack.c.b16 %v617, %v614
    %v726 = vpack.c.b16 %v618, %v615
    %v727 = vpack.c.b16 %v619, %v616
    %v728 = vpack.c.b16 %v623, %v620
    %v729 = vpack.c.b16 %v624, %v621
    %v730 = vpack.c.b16 %v625, %v622
    %v731 = vpack.c.b16 %v629, %v626
    %v732 = vpack.c.b16 %v630, %v627
    %v733 = vpack.c.b16 %v631, %v628
    %v734 = vpack.c.b16 %v635, %v632
    %v735 = vpack.c.b16 %v636, %v633
    %v736 = vpack.c.b16 %v637, %v634
    %v737 = vpack.c.b16 %v641, %v638
    %v738 = vpack.c.b16 %v642, %v639
    %v739 = vpack.c.b16 %v643, %v640
    %836 = vmatprep.subr.bf16.mxu0 %v645
    %837 = vmatpush1.bf16.msra.mxu0 %v644
    %838 = vmatprep.subr.bf16.mxu0 %v648
    %839 = vmatpush1.bf16.msra.mxu0 %v647
    %840 = vmatprep.subr.bf16.mxu0 %v651
    %841 = vmatpush1.bf16.msra.mxu0 %v650
    %842 = vmatprep.subr.bf16.mxu0 %v654
    %843 = vmatpush1.bf16.msra.mxu0 %v653
    %844 = vmatprep.subr.bf16.mxu0 %v657
    %845 = vmatpush1.bf16.msra.mxu0 %v656
    %846 = vmatprep.subr.bf16.mxu0 %v660
    %847 = vmatpush1.bf16.msra.mxu0 %v659
    %848 = vmatprep.subr.bf16.mxu0 %v663
    %849 = vmatpush1.bf16.msra.mxu0 %v662
    %850 = vmatprep.subr.bf16.mxu0 %v666
    %851 = vmatpush1.bf16.msra.mxu0 %v665
    %852 = vmatprep.subr.bf16.mxu0 %v669
    %853 = vmatpush1.bf16.msra.mxu0 %v668
    %854 = vmatprep.subr.bf16.mxu0 %v672
    %855 = vmatpush1.bf16.msra.mxu0 %v671
    %856 = vmatprep.subr.bf16.mxu0 %v675
    %857 = vmatpush1.bf16.msra.mxu0 %v674
    %858 = vmatprep.subr.bf16.mxu0 %v678
    %859 = vmatpush1.bf16.msra.mxu0 %v677
    %860 = vmatprep.subr.bf16.mxu0 %v681
    %861 = vmatpush1.bf16.msra.mxu0 %v680
    %862 = vmatprep.subr.bf16.mxu0 %v684
    %863 = vmatpush1.bf16.msra.mxu0 %v683
    %864 = vmatprep.subr.bf16.mxu0 %v687
    %865 = vmatpush1.bf16.msra.mxu0 %v686
    %866 = vmatprep.subr.bf16.mxu0 %v690
    %867 = vmatpush1.bf16.msra.mxu0 %v689
    %868 = vmatprep.mubr.bf16.mxu0 %v177
    %869 = vmatmul.mubr.bf16.gmra.mrb[0].mxu0 %v176
    %v870 = vpop.f32.mrb[0].mxu0
    %v871 = vadd.f32 %v312, %v870
    %v872 = vpop.f32.mrb[0].mxu0
    %v873 = vadd.f32 %v316, %v872
    %v874 = vpop.f32.mrb[0].mxu0
    %v875 = vpop.f32.mrb[0].mxu0
    %876 = vdwg.mxu0
    %877 = vmatprep.subr.bf16.mxu0 %v693
    %878 = vmatpush1.bf16.msra.mxu0 %v692
    %879 = vmatprep.subr.bf16.mxu0 %v696
    %880 = vmatpush1.bf16.msra.mxu0 %v695
    %881 = vmatprep.subr.bf16.mxu0 %v699
    %882 = vmatpush1.bf16.msra.mxu0 %v698
    %883 = vmatprep.subr.bf16.mxu0 %v702
    %884 = vmatpush1.bf16.msra.mxu0 %v701
    %885 = vmatprep.subr.bf16.mxu0 %v705
    %886 = vmatpush1.bf16.msra.mxu0 %v704
    %887 = vmatprep.subr.bf16.mxu0 %v708
    %888 = vmatpush1.bf16.msra.mxu0 %v707
    %889 = vmatprep.subr.bf16.mxu0 %v711
    %890 = vmatpush1.bf16.msra.mxu0 %v710
    %891 = vmatprep.subr.bf16.mxu0 %v714
    %892 = vmatpush1.bf16.msra.mxu0 %v713
    %893 = vmatprep.subr.bf16.mxu0 %v717
    %894 = vmatpush1.bf16.msra.mxu0 %v716
    %895 = vmatprep.subr.bf16.mxu0 %v720
    %896 = vmatpush1.bf16.msra.mxu0 %v719
    %897 = vmatprep.subr.bf16.mxu0 %v723
    %898 = vmatpush1.bf16.msra.mxu0 %v722
    %899 = vmatprep.subr.bf16.mxu0 %v726
    %900 = vmatpush1.bf16.msra.mxu0 %v725
    %901 = vmatprep.subr.bf16.mxu0 %v729
    %902 = vmatpush1.bf16.msra.mxu0 %v728
    %903 = vmatprep.subr.bf16.mxu0 %v732
    %904 = vmatpush1.bf16.msra.mxu0 %v731
    %905 = vmatprep.subr.bf16.mxu0 %v735
    %906 = vmatpush1.bf16.msra.mxu0 %v734
    %907 = vmatprep.subr.bf16.mxu0 %v738
    %908 = vmatpush1.bf16.msra.mxu0 %v737
    %909 = vmatprep.mubr.bf16.mxu0 %v179
    %910 = vmatmul.mubr.bf16.gmra.mrb[0].mxu0 %v178
    %v911 = vpop.f32.mrb[0].mxu0
    %v912 = vadd.f32 %v871, %v911
    %v913 = vpop.f32.mrb[0].mxu0
    %v914 = vadd.f32 %v873, %v913
    %v915 = vpop.f32.mrb[0].mxu0
    %v916 = vpop.f32.mrb[0].mxu0
    %917 = vdwg.mxu0
    %918 = vmatprep.subr.bf16.mxu0 0
    %919 = vmatpush1.bf16.msra.mxu0 %v646
    %920 = vmatprep.subr.bf16.mxu0 0
    %921 = vmatpush1.bf16.msra.mxu0 %v649
    %922 = vmatprep.subr.bf16.mxu0 0
    %923 = vmatpush1.bf16.msra.mxu0 %v652
    %924 = vmatprep.subr.bf16.mxu0 0
    %925 = vmatpush1.bf16.msra.mxu0 %v655
    %926 = vmatprep.subr.bf16.mxu0 0
    %927 = vmatpush1.bf16.msra.mxu0 %v658
    %928 = vmatprep.subr.bf16.mxu0 0
    %929 = vmatpush1.bf16.msra.mxu0 %v661
    %930 = vmatprep.subr.bf16.mxu0 0
    %931 = vmatpush1.bf16.msra.mxu0 %v664
    %932 = vmatprep.subr.bf16.mxu0 0
    %933 = vmatpush1.bf16.msra.mxu0 %v667
    %934 = vmatprep.subr.bf16.mxu0 0
    %935 = vmatpush1.bf16.msra.mxu0 %v670
    %936 = vmatprep.subr.bf16.mxu0 0
    %937 = vmatpush1.bf16.msra.mxu0 %v673
    %938 = vmatprep.subr.bf16.mxu0 0
    %939 = vmatpush1.bf16.msra.mxu0 %v676
    %940 = vmatprep.subr.bf16.mxu0 0
    %941 = vmatpush1.bf16.msra.mxu0 %v679
    %942 = vmatprep.subr.bf16.mxu0 0
    %943 = vmatpush1.bf16.msra.mxu0 %v682
    %944 = vmatprep.subr.bf16.mxu0 0
    %945 = vmatpush1.bf16.msra.mxu0 %v685
    %946 = vmatprep.subr.bf16.mxu0 0
    %947 = vmatpush1.bf16.msra.mxu0 %v688
    %948 = vmatprep.subr.bf16.mxu0 0
    %949 = vmatpush1.bf16.msra.mxu0 %v691
    %950 = vmatprep.mubr.bf16.mxu0 %v177
    %951 = vmatmul.mubr.bf16.gmra.mrb[0].mxu0 %v176
    %v952 = vpop.f32.mrb[0].mxu0
    %v953 = vadd.f32 %v320, %v952
    %v954 = vpop.f32.mrb[0].mxu0
    %v955 = vpop.f32.mrb[0].mxu0
    %v956 = vpop.f32.mrb[0].mxu0
    %957 = vdwg.mxu0
    %958 = vmatprep.subr.bf16.mxu0 0
    %959 = vmatpush1.bf16.msra.mxu0 %v694
    %960 = vmatprep.subr.bf16.mxu0 0
    %961 = vmatpush1.bf16.msra.mxu0 %v697
    %962 = vmatprep.subr.bf16.mxu0 0
    %963 = vmatpush1.bf16.msra.mxu0 %v700
    %964 = vmatprep.subr.bf16.mxu0 0
    %965 = vmatpush1.bf16.msra.mxu0 %v703
    %966 = vmatprep.subr.bf16.mxu0 0
    %967 = vmatpush1.bf16.msra.mxu0 %v706
    %968 = vmatprep.subr.bf16.mxu0 0
    %969 = vmatpush1.bf16.msra.mxu0 %v709
    %970 = vmatprep.subr.bf16.mxu0 0
    %971 = vmatpush1.bf16.msra.mxu0 %v712
    %972 = vmatprep.subr.bf16.mxu0 0
    %973 = vmatpush1.bf16.msra.mxu0 %v715
    %974 = vmatprep.subr.bf16.mxu0 0
    %975 = vmatpush1.bf16.msra.mxu0 %v718
    %976 = vmatprep.subr.bf16.mxu0 0
    %977 = vmatpush1.bf16.msra.mxu0 %v721
    %978 = vmatprep.subr.bf16.mxu0 0
    %979 = vmatpush1.bf16.msra.mxu0 %v724
    %980 = vmatprep.subr.bf16.mxu0 0
    %981 = vmatpush1.bf16.msra.mxu0 %v727
    %982 = vmatprep.subr.bf16.mxu0 0
    %983 = vmatpush1.bf16.msra.mxu0 %v730
    %984 = vmatprep.subr.bf16.mxu0 0
    %985 = vmatpush1.bf16.msra.mxu0 %v733
    %986 = vmatprep.subr.bf16.mxu0 0
    %987 = vmatpush1.bf16.msra.mxu0 %v736
    %988 = vmatprep.subr.bf16.mxu0 0
    %989 = vmatpush1.bf16.msra.mxu0 %v739
    %990 = vmatprep.mubr.bf16.mxu0 %v179
    %991 = vmatmul.mubr.bf16.gmra.mrb[0].mxu0 %v178
    %v992 = vpop.f32.mrb[0].mxu0
    %v993 = vadd.f32 %v953, %v992
    %v994 = vpop.f32.mrb[0].mxu0
    %v995 = vpop.f32.mrb[0].mxu0
    %v996 = vpop.f32.mrb[0].mxu0
    %997 = vdwg.mxu0
    %v998 = vmax.f32 %v912, 0.0
    %v999 = vmax.f32 %v914, 0.0
    %v1000 = vmax.f32 %v993, 0.0
    %v1001 = vpack.c.bf16 %v998, %v998
    %v1002 = vpack.c.bf16 %v999, %v999
    %v1003 = vpack.c.bf16 %v1000, %v1000
    %v1004 = vld [vmem:[%s3] sm:$0xf]
    %v1005 = vld [vmem:[%s3 + $0x4] sm:$0xf]
    %v1006 = vld [vmem:[%s3 + $0x8] sm:$0xf]
    %v1007 = vld [vmem:[%s3 + $0xc] sm:$0xf]
    %v1008 = vld [vmem:[%s3 + $0x10] sm:$0xf]
    %v1009 = vld [vmem:[%s3 + $0x14] sm:$0xf]
    %v1010 = vld [vmem:[%s3 + $0x18] sm:$0xf]
    %v1011 = vld [vmem:[%s3 + $0x1c] sm:$0xf]
    %v1012 = vld [vmem:[%s3 + $0x20] sm:$0xf]
    %v1013 = vld [vmem:[%s3 + $0x24] sm:$0xf]
    %v1014 = vld [vmem:[%s3 + $0x28] sm:$0xf]
    %v1015 = vld [vmem:[%s3 + $0x2c] sm:$0xf]
    %v1016 = vld [vmem:[%s3 + $0x30] sm:$0xf]
    %v1017 = vld [vmem:[%s3 + $0x34] sm:$0xf]
    %v1018 = vld [vmem:[%s3 + $0x38] sm:$0xf]
    %v1019 = vld [vmem:[%s3 + $0x3c] sm:$0xf]
    %v1020 = vld [vmem:[%s3 + $0x40] sm:$0xf]
    %v1021 = vld [vmem:[%s3 + $0x44] sm:$0xf]
    %v1022 = vld [vmem:[%s3 + $0x48] sm:$0xf]
    %v1023 = vld [vmem:[%s3 + $0x4c] sm:$0xf]
    %v1024 = vld [vmem:[%s3 + $0x50] sm:$0xf]
    %v1025 = vld [vmem:[%s3 + $0x54] sm:$0xf]
    %v1026 = vld [vmem:[%s3 + $0x58] sm:$0xf]
    %v1027 = vld [vmem:[%s3 + $0x5c] sm:$0xf]
    %v1028 = vld [vmem:[%s3 + $0x60] sm:$0xf]
    %v1029 = vld [vmem:[%s3 + $0x64] sm:$0xf]
    %v1030 = vld [vmem:[%s3 + $0x68] sm:$0xf]
    %v1031 = vld [vmem:[%s3 + $0x6c] sm:$0xf]
    %v1032 = vld [vmem:[%s3 + $0x70] sm:$0xf]
    %v1033 = vld [vmem:[%s3 + $0x74] sm:$0xf]
    %v1034 = vld [vmem:[%s3 + $0x78] sm:$0xf]
    %v1035 = vld [vmem:[%s3 + $0x7c] sm:$0xf]
    %v1036 = vld [vmem:[%s3 + $0x80] sm:$0xf]
    %v1037 = vld [vmem:[%s3 + $0x84] sm:$0xf]
    %v1038 = vld [vmem:[%s3 + $0x88] sm:$0xf]
    %v1039 = vld [vmem:[%s3 + $0x8c] sm:$0xf]
    %v1040 = vld [vmem:[%s3 + $0x90] sm:$0xf]
    %v1041 = vld [vmem:[%s3 + $0x94] sm:$0xf]
    %v1042 = vld [vmem:[%s3 + $0x98] sm:$0xf]
    %v1043 = vld [vmem:[%s3 + $0x9c] sm:$0xf]
    %v1044 = vld [vmem:[%s3 + $0xa0] sm:$0xf]
    %v1045 = vld [vmem:[%s3 + $0xa4] sm:$0xf]
    %v1046 = vld [vmem:[%s3 + $0xa8] sm:$0xf]
    %v1047 = vld [vmem:[%s3 + $0xac] sm:$0xf]
    %v1048 = vld [vmem:[%s3 + $0xb0] sm:$0xf]
    %v1049 = vld [vmem:[%s3 + $0xb4] sm:$0xf]
    %v1050 = vld [vmem:[%s3 + $0xb8] sm:$0xf]
    %v1051 = vld [vmem:[%s3 + $0xbc] sm:$0xf]
    %v1053 = vlaneseq
    %v1054 = vshrl.u32 %v1053, 7
    %v1055 = vsub.s32 0, %v1054
    %v1056 = vrot.slane %v38, %v1055
    %v1106 = vunpack.c.l.b16 %v1004
    %v1107 = vunpack.c.l.b16 %v1005
    %v1108 = vunpack.c.l.b16 %v1006
    %v1109 = vunpack.c.l.b16 %v1007
    %v1110 = vunpack.c.l.b16 %v1008
    %v1111 = vunpack.c.l.b16 %v1009
    %v1112 = vunpack.c.l.b16 %v1010
    %v1113 = vunpack.c.l.b16 %v1011
    %v1114 = vunpack.c.l.b16 %v1012
    %v1115 = vunpack.c.l.b16 %v1013
    %v1116 = vunpack.c.l.b16 %v1014
    %v1117 = vunpack.c.l.b16 %v1015
    %v1118 = vunpack.c.l.b16 %v1016
    %v1119 = vunpack.c.l.b16 %v1017
    %v1120 = vunpack.c.l.b16 %v1018
    %v1121 = vunpack.c.l.b16 %v1019
    %v1122 = vunpack.c.l.b16 %v1020
    %v1123 = vunpack.c.l.b16 %v1021
    %v1124 = vunpack.c.l.b16 %v1022
    %v1125 = vunpack.c.l.b16 %v1023
    %v1126 = vunpack.c.l.b16 %v1024
    %v1127 = vunpack.c.l.b16 %v1025
    %v1128 = vunpack.c.l.b16 %v1026
    %v1129 = vunpack.c.l.b16 %v1027
    %v1130 = vunpack.c.l.b16 %v1028
    %v1131 = vunpack.c.l.b16 %v1029
    %v1132 = vunpack.c.l.b16 %v1030
    %v1133 = vunpack.c.l.b16 %v1031
    %v1134 = vunpack.c.l.b16 %v1032
    %v1135 = vunpack.c.l.b16 %v1033
    %v1136 = vunpack.c.l.b16 %v1034
    %v1137 = vunpack.c.l.b16 %v1035
    %v1138 = vunpack.c.l.b16 %v1036
    %v1139 = vunpack.c.l.b16 %v1037
    %v1140 = vunpack.c.l.b16 %v1038
    %v1141 = vunpack.c.l.b16 %v1039
    %v1142 = vunpack.c.l.b16 %v1040
    %v1143 = vunpack.c.l.b16 %v1041
    %v1144 = vunpack.c.l.b16 %v1042
    %v1145 = vunpack.c.l.b16 %v1043
    %v1146 = vunpack.c.l.b16 %v1044
    %v1147 = vunpack.c.l.b16 %v1045
    %v1148 = vunpack.c.l.b16 %v1046
    %v1149 = vunpack.c.l.b16 %v1047
    %v1150 = vunpack.c.l.b16 %v1048
    %v1151 = vunpack.c.l.b16 %v1049
    %v1152 = vunpack.c.l.b16 %v1050
    %v1153 = vunpack.c.l.b16 %v1051
    %v1154 = vpack.c.b16 %v1107, %v1106
    %v1155 = vpack.c.b16 %v1109, %v1108
    %v1156 = vpack.c.b16 %v1111, %v1110
    %v1157 = vpack.c.b16 %v1113, %v1112
    %v1158 = vpack.c.b16 %v1115, %v1114
    %v1159 = vpack.c.b16 %v1117, %v1116
    %v1160 = vpack.c.b16 %v1119, %v1118
    %v1161 = vpack.c.b16 %v1121, %v1120
    %v1162 = vpack.c.b16 %v1123, %v1122
    %v1163 = vpack.c.b16 %v1125, %v1124
    %v1164 = vpack.c.b16 %v1127, %v1126
    %v1165 = vpack.c.b16 %v1129, %v1128
    %v1166 = vpack.c.b16 %v1131, %v1130
    %v1167 = vpack.c.b16 %v1133, %v1132
    %v1168 = vpack.c.b16 %v1135, %v1134
    %v1169 = vpack.c.b16 %v1137, %v1136
    %v1170 = vpack.c.b16 %v1139, %v1138
    %v1171 = vpack.c.b16 %v1141, %v1140
    %v1172 = vpack.c.b16 %v1143, %v1142
    %v1173 = vpack.c.b16 %v1145, %v1144
    %v1174 = vpack.c.b16 %v1147, %v1146
    %v1175 = vpack.c.b16 %v1149, %v1148
    %v1176 = vpack.c.b16 %v1151, %v1150
    %v1177 = vpack.c.b16 %v1153, %v1152
    %1202 = vmatprep.subr.bf16.mxu0 0
    %1203 = vmatpush1.bf16.msra.mxu0 %v1154
    %1204 = vmatprep.subr.bf16.mxu0 0
    %1205 = vmatpush1.bf16.msra.mxu0 %v1155
    %1206 = vmatprep.subr.bf16.mxu0 0
    %1207 = vmatpush1.bf16.msra.mxu0 %v1156
    %1208 = vmatprep.subr.bf16.mxu0 0
    %1209 = vmatpush1.bf16.msra.mxu0 %v1157
    %1210 = vmatprep.subr.bf16.mxu0 0
    %1211 = vmatpush1.bf16.msra.mxu0 %v1158
    %1212 = vmatprep.subr.bf16.mxu0 0
    %1213 = vmatpush1.bf16.msra.mxu0 %v1159
    %1214 = vmatprep.subr.bf16.mxu0 0
    %1215 = vmatpush1.bf16.msra.mxu0 %v1160
    %1216 = vmatprep.subr.bf16.mxu0 0
    %1217 = vmatpush1.bf16.msra.mxu0 %v1161
    %1218 = vmatprep.subr.bf16.mxu0 0
    %1219 = vmatpush1.bf16.msra.mxu0 %v1162
    %1220 = vmatprep.subr.bf16.mxu0 0
    %1221 = vmatpush1.bf16.msra.mxu0 %v1163
    %1222 = vmatprep.subr.bf16.mxu0 0
    %1223 = vmatpush1.bf16.msra.mxu0 %v1164
    %1224 = vmatprep.subr.bf16.mxu0 0
    %1225 = vmatpush1.bf16.msra.mxu0 %v1165
    %1226 = vmatprep.subr.bf16.mxu0 0
    %1227 = vmatpush1.bf16.msra.mxu0 %v1166
    %1228 = vmatprep.subr.bf16.mxu0 0
    %1229 = vmatpush1.bf16.msra.mxu0 %v1167
    %1230 = vmatprep.subr.bf16.mxu0 0
    %1231 = vmatpush1.bf16.msra.mxu0 %v1168
    %1232 = vmatprep.subr.bf16.mxu0 0
    %1233 = vmatpush1.bf16.msra.mxu0 %v1169
    %1234 = vmatprep.mubr.bf16.mxu0 %v1002
    %1235 = vmatmul.mubr.bf16.gmra.mrb[0].mxu0 %v1001
    %v1236 = vpop.f32.mrb[0].mxu0
    %v1237 = vadd.f32 %v1056, %v1236
    %v1238 = vpop.f32.mrb[0].mxu0
    %v1239 = vpop.f32.mrb[0].mxu0
    %v1240 = vpop.f32.mrb[0].mxu0
    %1241 = vdwg.mxu0
    %1242 = vmatprep.subr.bf16.mxu0 0
    %1243 = vmatpush1.bf16.msra.mxu0 %v1170
    %1244 = vmatprep.subr.bf16.mxu0 0
    %1245 = vmatpush1.bf16.msra.mxu0 %v1171
    %1246 = vmatprep.subr.bf16.mxu0 0
    %1247 = vmatpush1.bf16.msra.mxu0 %v1172
    %1248 = vmatprep.subr.bf16.mxu0 0
    %1249 = vmatpush1.bf16.msra.mxu0 %v1173
    %1250 = vmatprep.subr.bf16.mxu0 0
    %1251 = vmatpush1.bf16.msra.mxu0 %v1174
    %1252 = vmatprep.subr.bf16.mxu0 0
    %1253 = vmatpush1.bf16.msra.mxu0 %v1175
    %1254 = vmatprep.subr.bf16.mxu0 0
    %1255 = vmatpush1.bf16.msra.mxu0 %v1176
    %1256 = vmatprep.subr.bf16.mxu0 0
    %1257 = vmatpush1.bf16.msra.mxu0 %v1177
    %1258 = vmatprep.subr.bf16.mxu0 0
    %1259 = vmatpush1.bf16.msra.mxu0 0
    %1260 = vmatprep.subr.bf16.mxu0 0
    %1261 = vmatpush1.bf16.msra.mxu0 0
    %1262 = vmatprep.subr.bf16.mxu0 0
    %1263 = vmatpush1.bf16.msra.mxu0 0
    %1264 = vmatprep.subr.bf16.mxu0 0
    %1265 = vmatpush1.bf16.msra.mxu0 0
    %1266 = vmatprep.subr.bf16.mxu0 0
    %1267 = vmatpush1.bf16.msra.mxu0 0
    %1268 = vmatprep.subr.bf16.mxu0 0
    %1269 = vmatpush1.bf16.msra.mxu0 0
    %1270 = vmatprep.subr.bf16.mxu0 0
    %1271 = vmatpush1.bf16.msra.mxu0 0
    %1272 = vmatprep.subr.bf16.mxu0 0
    %1273 = vmatpush1.bf16.msra.mxu0 0
    %1274 = vmatprep.mubr.bf16.mxu0 0
    %1275 = vmatmul.mubr.bf16.gmra.mrb[0].mxu0 %v1003
    %v1276 = vpop.f32.mrb[0].mxu0
    %v1277 = vadd.f32 %v1237, %v1276
    %v1278 = vpop.f32.mrb[0].mxu0
    %v1279 = vpop.f32.mrb[0].mxu0
    %v1280 = vpop.f32.mrb[0].mxu0
    %1281 = vdwg.mxu0
    %v1282 = vtanh.pop %v1277
    %vm1283 = vcmask 27648
    %1284 = vst.msk [vmem:[#allocation5] sm:$0xf] %vm1283, %v1282
    // Predicated region
    $region26: #{tpu_custom_call.1} parent=1 // pred_check
      _
    $region27: #{tpu_custom_call.1} parent=1 // pred_check_branch
      %1286 = sbr.rel (0) target = $region29
    $region28: #{tpu_custom_call.1} parent=1 // pred_region
      %s1288 = ssub.s32 64, 64
      %1289 = vsyncadd [#allocation4], %s1288
      %s1291 = sshll.u32 [#allocation5], 4
      %s1292 = int_to_ptr.vmem [resolvable:$true] %s1291
      %1294 = dma.vmem_to_hbm [thread:$0]  %s1292, 64, %s5, [#allocation4]
    $region29: #{tpu_custom_call.1} parent=1 // pred_fallthru
      _
    // Predicated region
    $region30: #{tpu_custom_call.1} parent=1 // pred_check
      _
    $region31: #{tpu_custom_call.1} parent=1 // pred_check_branch
      %1296 = sbr.rel (0) target = $region33
    $region32: #{tpu_custom_call.1} parent=1 // pred_region
      %1297 = dma.done [#allocation4], 64
    $region33: #{tpu_custom_call.1} parent=1 // pred_fallthru
      _
    %1298 = vsyncpa [#allocation3], 1
    %1299 = vsyncpa [#allocation4], 1

</llo_original>
